<compile_context>
chip_gen: v7x
topology: tpu7x:2x2x1
jax: 0.10.0
libtpu: 0.0.40
codegen_flags: <defaults>
</compile_context>

<pallas_src>
import functools

import jax
import jax.numpy as jnp
from jax.experimental import pallas as pl
from jax.experimental.pallas import tpu as pltpu

_EPS = 1e-8
_LANE = 128


def _round_up(x, m):
    return (x + m - 1) // m * m


def _block_diag3(w):
    """blockdiag(w, w, w) for a 2-D weight (applies w independently to x,y,z)."""
    m, n = w.shape
    out = jnp.zeros((3 * m, 3 * n), w.dtype)
    for k in range(3):
        out = out.at[k * m:(k + 1) * m, k * n:(k + 1) * n].set(w)
    return out


def _vmem_limit_bytes():
    """Generation-aware VMEM limit: ~3/4 of physical, capped at 96 MiB.

    v5e/v6e (128 MiB physical) -> 96 MiB; v7x (64 MiB physical) -> 48 MiB.
    Conservative 48 MiB fallback if the hardware query is unavailable.
    """
    cap = None
    try:
        info = pltpu.get_tpu_info()
        cap = getattr(info, "vmem_capacity_bytes", None)
    except Exception:
        cap = None
    if not cap:
        cap = 64 * 1024 * 1024
    return int(min(cap * 3 // 4, 96 * 1024 * 1024))


def _gvp_kernel(s_ref, v_ref, wvec_ref, wss_ref, wsv_ref, b_ref,
                s_out_ref, v_out_ref, *, h, vo, eps):
    """One row tile (TN nodes), channel-major (lane axis = node axis).

    s_ref    : (si, TN)          scalar features
    v_ref    : (3*vi, TN)        vector features, components stacked on sublanes
    wvec_ref : (3h+3vo, 3*vi)    [blockdiag(Wh x3); blockdiag(Wv@Wh x3)]
    wss_ref  : (so, si)          Ws scalar half
    wsv_ref  : (so, h)           Ws vector-norm half
    b_ref    : (so, 1)           Ws bias (f32)
    outputs  : s_out (so, TN), v_out (3*vo, TN)
    """
    # Single fused MXU matmul for the whole vector path:
    #   rows [0, 3h)       -> vh_k  = Wh @ V_k          (k = x, y, z)
    #   rows [3h, 3h+3vo)  -> vout_k = (Wv @ Wh) @ V_k
    vcat = jnp.dot(wvec_ref[...], v_ref[...], preferred_element_type=jnp.float32)

    vh = [vcat[k * h:(k + 1) * h] for k in range(3)]          # (h, TN) each, f32
    # _norm_no_nan over the 3 spatial components (clamp before sqrt, f32).
    vn = jnp.sqrt(jnp.maximum(vh[0] * vh[0] + vh[1] * vh[1] + vh[2] * vh[2], eps))

    # ws(concat([s, vn])) == Wss @ s + Wsv @ vn + b   (no explicit concat)
    s_lin = (jnp.dot(wss_ref[...], s_ref[...], preferred_element_type=jnp.float32)
             + jnp.dot(wsv_ref[...], vn.astype(wsv_ref.dtype),
                       preferred_element_type=jnp.float32)
             + b_ref[...])
    # scalar_act = relu6
    s_out_ref[...] = jnp.clip(s_lin, 0.0, 6.0).astype(s_out_ref.dtype)

    base = 3 * h
    vout = [vcat[base + k * vo: base + (k + 1) * vo] for k in range(3)]
    # Non-gated vector update: V' = V * sigmoid(||V||)   (vector_act = sigmoid)
    vnorm = jnp.sqrt(jnp.maximum(
        vout[0] * vout[0] + vout[1] * vout[1] + vout[2] * vout[2], eps))
    gate = jax.nn.sigmoid(vnorm)                               # EUP, f32
    for k in range(3):
        v_out_ref[k * vo:(k + 1) * vo, :] = (vout[k] * gate).astype(v_out_ref.dtype)


def gvp_forward_native(s_t, v_t, params, *, tile_n=4096):
    """GVP forward in kernel-native (channel-major) layout, no HBM transposes.

    s_t : (si, N)                          scalar features
    v_t : (3, vi, N) or (3*vi, N)          vector features, component-major
    params (PyTorch weight layout):
        wh   : (h, vi)        nn.Linear(vi, h, bias=False)
        ws_w : (so, si + h)   nn.Linear(si + h, so) weight
        ws_b : (so,)          nn.Linear(si + h, so) bias
        wv   : (vo, h)        nn.Linear(h, vo, bias=False)
    Returns (s_out (so, N), v_out (3, vo, N)), same dtype as s_t.
    """
    # TODO(synk): vi == 0 / vo == 0 branches and vector_gate=True (wsv gating)
    # are not implemented; the module's default configuration does not use them.
    si, N = s_t.shape
    if v_t.ndim == 3:
        assert v_t.shape[0] == 3 and v_t.shape[2] == N
        vi = v_t.shape[1]
        v_t = v_t.reshape(3 * vi, N)        # merge leading dims: free re-view
    else:
        vi = v_t.shape[0] // 3
    assert v_t.shape == (3 * vi, N)

    wh = jnp.asarray(params["wh"], jnp.float32)       # (h, vi)
    ws_w = jnp.asarray(params["ws_w"], jnp.float32)   # (so, si + h)
    ws_b = jnp.asarray(params["ws_b"], jnp.float32)   # (so,)
    wv = jnp.asarray(params["wv"], jnp.float32)       # (vo, h)
    h, so, vo = wh.shape[0], ws_w.shape[0], wv.shape[0]
    assert ws_w.shape[1] == si + h

    dtype = s_t.dtype
    v_t = v_t.astype(dtype)

    # Weight prep (f32 fusion, then cast MXU operands to the I/O dtype).
    wvo = jnp.dot(wv, wh, precision=jax.lax.Precision.HIGHEST)   # (vo, vi)
    wvec = jnp.concatenate([_block_diag3(wh), _block_diag3(wvo)],
                           axis=0).astype(dtype)                  # (3h+3vo, 3vi)
    wss = ws_w[:, :si].astype(dtype)                              # (so, si)
    wsv = ws_w[:, si:].astype(dtype)                              # (so, h)
    b = ws_b.reshape(so, 1)                                       # (so, 1) f32

    # ---- tile / grid sizing ------------------------------------------------
    vmem_limit = _vmem_limit_bytes()
    n_lane = _round_up(N, _LANE)
    tile = _round_up(max(int(tile_n), _LANE), _LANE)
    # Keep >=2 grid steps whenever N allows it so v7x's two TensorCores both
    # receive work from the "parallel" grid axis.
    if n_lane >= 2 * _LANE:
        tile = min(tile, _round_up(pl.cdiv(n_lane, 2), _LANE))
    tile = min(tile, n_lane)
    # VMEM budget guard: double-buffered I/O tiles + f32 intermediates.
    dsize = jnp.dtype(dtype).itemsize
    per_node = ((si + 3 * vi + so + 3 * vo) * dsize * 2
                + (3 * h + 3 * vo + h + so + 2 * vo) * 4)
    cap = max(_LANE, (vmem_limit // 2 // per_node) // _LANE * _LANE)
    tile = min(tile, cap)

    n_pad = _round_up(n_lane, tile)
    if n_pad != N:
        s_t = jnp.pad(s_t, ((0, 0), (0, n_pad - N)))
        v_t = jnp.pad(v_t, ((0, 0), (0, n_pad - N)))
    grid = (n_pad // tile,)

    def resident(arr):
        nd = arr.ndim
        return pl.BlockSpec(arr.shape, lambda i, _nd=nd: (0,) * _nd)

    # TODO(synk): if profiling shows exposed DMA, add
    # pipeline_mode=pl.Buffered(3) on the s / V input specs below.
    s_out_t, v_out_flat = pl.pallas_call(
        functools.partial(_gvp_kernel, h=h, vo=vo, eps=_EPS),
        out_shape=(
            jax.ShapeDtypeStruct((so, n_pad), dtype),
            jax.ShapeDtypeStruct((3 * vo, n_pad), dtype),
        ),
        grid_spec=pltpu.PrefetchScalarGridSpec(
            num_scalar_prefetch=0,
            grid=grid,
            in_specs=[
                pl.BlockSpec((si, tile), lambda i: (0, i)),        # s tile
                pl.BlockSpec((3 * vi, tile), lambda i: (0, i)),    # V tile
                resident(wvec),
                resident(wss),
                resident(wsv),
                resident(b),
            ],
            out_specs=(
                pl.BlockSpec((so, tile), lambda i: (0, i)),
                pl.BlockSpec((3 * vo, tile), lambda i: (0, i)),
            ),
        ),
        compiler_params=pltpu.CompilerParams(
            dimension_semantics=("parallel",),
            vmem_limit_bytes=vmem_limit,
        ),
    )(s_t, v_t, wvec, wss, wsv, b)

    s_out_t = s_out_t[:, :N]
    v_out_t = v_out_flat.reshape(3, vo, n_pad)[:, :, :N]   # split leading dim: free
    return s_out_t, v_out_t


def gvp_forward(s, v, params, *, tile_n=4096):
    """PyTorch-layout adapter: s (N, si), v (N, vi, 3) -> (N, so), (N, vo, 3).

    NOTE: this pays extra HBM transposes around the kernel.  For end-to-end
    performance keep tensors channel-major and call gvp_forward_native.
    """
    s_t = jnp.transpose(s)                 # (si, N)
    v_t = jnp.transpose(v, (2, 1, 0))      # (3, vi, N)
    s_out_t, v_out_t = gvp_forward_native(s_t, v_t, params, tile_n=tile_n)
    return jnp.transpose(s_out_t), jnp.transpose(v_out_t, (2, 1, 0))


def gvp_reference(s, v, params):
    """Pure-JAX mirror of the PyTorch GVP forward (default config)."""
    wh, ws_w, ws_b, wv = params["wh"], params["ws_w"], params["ws_b"], params["wv"]
    vt = jnp.swapaxes(v, -1, -2)                                   # (N, 3, vi)
    vh = vt @ wh.T                                                 # (N, 3, h)
    vn = jnp.sqrt(jnp.maximum(jnp.sum(vh * vh, axis=-2), _EPS))    # (N, h)
    s_out = jnp.concatenate([s, vn], axis=-1) @ ws_w.T + ws_b      # (N, so)
    v_out = vh @ wv.T                                              # (N, 3, vo)
    v_out = jnp.swapaxes(v_out, -1, -2)                            # (N, vo, 3)
    vnorm = jnp.sqrt(jnp.maximum(jnp.sum(v_out * v_out, -1, keepdims=True), _EPS))
    v_out = v_out * jax.nn.sigmoid(vnorm)
    s_out = jnp.clip(s_out, 0.0, 6.0)                              # relu6
    return s_out, v_out


if __name__ == "__main__":
    key = jax.random.PRNGKey(0)
    ks = jax.random.split(key, 6)

    N, si, vi = 512, 32, 16       # nodes, scalar-in, vector-in channels
    so, vo = 32, 16               # scalar-out, vector-out channels
    h = max(vi, vo)               # h_dim = max(vi, vo)

    s = jax.random.normal(ks[0], (N, si), dtype=jnp.float32)
    v = jax.random.normal(ks[1], (N, vi, 3), dtype=jnp.float32)

    params = {
        "wh": jax.random.normal(ks[2], (h, vi), jnp.float32) / jnp.sqrt(vi),
        "ws_w": jax.random.normal(ks[3], (so, si + h), jnp.float32) / jnp.sqrt(si + h),
        "ws_b": jax.random.normal(ks[4], (so,), jnp.float32) * 0.1,
        "wv": jax.random.normal(ks[5], (vo, h), jnp.float32) / jnp.sqrt(h),
    }

    s_ref, v_ref = gvp_reference(s, v, params)

    # f32 run via the PyTorch-layout adapter; default tile gets clamped to
    # N // 2 = 256 -> a 2-step grid (exercises pipelining / both-TC split).
    s_out, v_out = gvp_forward(s, v, params)
    jax.block_until_ready((s_out, v_out))
    assert s_out.shape == (N, so) and v_out.shape == (N, vo, 3)
    assert bool(jnp.allclose(s_out, s_ref, atol=1e-2, rtol=1e-2))
    assert bool(jnp.allclose(v_out, v_ref, atol=1e-2, rtol=1e-2))

    # bf16 I/O run via the native channel-major entry point (no wrapper
    # transposes inside the perf path; halves HBM traffic).
    s_t = jnp.transpose(s).astype(jnp.bfloat16)               # (si, N)
    v_t = jnp.transpose(v, (2, 1, 0)).astype(jnp.bfloat16)    # (3, vi, N)
    s_out_t, v_out_t = gvp_forward_native(s_t, v_t, params)
    jax.block_until_ready((s_out_t, v_out_t))
    s_out_b = jnp.transpose(s_out_t).astype(jnp.float32)
    v_out_b = jnp.transpose(v_out_t, (2, 1, 0)).astype(jnp.float32)
    assert bool(jnp.allclose(s_out_b, s_ref, atol=1e-1, rtol=1e-1))
    assert bool(jnp.allclose(v_out_b, v_ref, atol=1e-1, rtol=1e-1))

    print("KERNEL_OK")
</pallas_src>

<mosaic_0001>
module attributes {stable_mosaic.version = 11 : i64} {
  func.func @_gvp_kernel(%arg0: i32, %arg1: memref<32x256xf32, #tpu.memory_space<vmem>>, %arg2: memref<48x256xf32, #tpu.memory_space<vmem>>, %arg3: memref<96x48xf32, #tpu.memory_space<vmem>>, %arg4: memref<32x32xf32, #tpu.memory_space<vmem>>, %arg5: memref<32x16xf32, #tpu.memory_space<vmem>>, %arg6: memref<32x1xf32, #tpu.memory_space<vmem>>, %arg7: memref<32x256xf32, #tpu.memory_space<vmem>>, %arg8: memref<48x256xf32, #tpu.memory_space<vmem>>) attributes {dimension_semantics = [#tpu.dimension_semantics<parallel>], iteration_bounds = array<i64: 2>, scalar_prefetch = 0 : i64, scratch_operands = 0 : i64, tpu.core_type = #tpu.core_type<tc>, window_params = [{transform_indices = @transform_0, window_bounds = array<i64: 32, 256>}, {transform_indices = @transform_1, window_bounds = array<i64: 48, 256>}, {pipeline_mode = #tpu.pipeline_mode<synchronous>, transform_indices = @transform_2, window_bounds = array<i64: 96, 48>}, {pipeline_mode = #tpu.pipeline_mode<synchronous>, transform_indices = @transform_3, window_bounds = array<i64: 32, 32>}, {pipeline_mode = #tpu.pipeline_mode<synchronous>, transform_indices = @transform_4, window_bounds = array<i64: 32, 16>}, {pipeline_mode = #tpu.pipeline_mode<synchronous>, transform_indices = @transform_5, window_bounds = array<i64: 32, 1>}, {transform_indices = @transform_6, window_bounds = array<i64: 32, 256>}, {transform_indices = @transform_7, window_bounds = array<i64: 48, 256>}]} {
    %c0 = arith.constant 0 : index
    %c0_0 = arith.constant 0 : index
    %0 = vector.load %arg3[%c0, %c0_0] : memref<96x48xf32, #tpu.memory_space<vmem>>, vector<96x48xf32>
    %c0_1 = arith.constant 0 : index
    %c0_2 = arith.constant 0 : index
    %1 = vector.load %arg2[%c0_1, %c0_2] : memref<48x256xf32, #tpu.memory_space<vmem>>, vector<48x256xf32>
    %cst = arith.constant dense<0.000000e+00> : vector<96x256xf32>
    %2 = tpu.matmul %0, %1, %cst {dimension_numbers = #tpu.dot_dimension_numbers<[1], [0], [0], [1], [0, 0, 1, 1], [], []>} : vector<96x48xf32>, vector<48x256xf32>, vector<96x256xf32> -> vector<96x256xf32>
    %3 = vector.extract_strided_slice %2 {offsets = [0, 0], sizes = [16, 256], strides = [1, 1]} : vector<96x256xf32> to vector<16x256xf32>
    %4 = vector.extract_strided_slice %2 {offsets = [16, 0], sizes = [16, 256], strides = [1, 1]} : vector<96x256xf32> to vector<16x256xf32>
    %5 = vector.extract_strided_slice %2 {offsets = [32, 0], sizes = [16, 256], strides = [1, 1]} : vector<96x256xf32> to vector<16x256xf32>
    %6 = arith.mulf %3, %3 : vector<16x256xf32>
    %7 = arith.mulf %4, %4 : vector<16x256xf32>
    %8 = arith.addf %6, %7 : vector<16x256xf32>
    %9 = arith.mulf %5, %5 : vector<16x256xf32>
    %10 = arith.addf %8, %9 : vector<16x256xf32>
    %cst_3 = arith.constant 9.99999993E-9 : f32
    %11 = vector.broadcast %cst_3 : f32 to vector<16x256xf32>
    %12 = arith.maximumf %10, %11 : vector<16x256xf32>
    %13 = math.sqrt %12 : vector<16x256xf32>
    %c0_4 = arith.constant 0 : index
    %c0_5 = arith.constant 0 : index
    %14 = vector.load %arg4[%c0_4, %c0_5] : memref<32x32xf32, #tpu.memory_space<vmem>>, vector<32x32xf32>
    %c0_6 = arith.constant 0 : index
    %c0_7 = arith.constant 0 : index
    %15 = vector.load %arg1[%c0_6, %c0_7] : memref<32x256xf32, #tpu.memory_space<vmem>>, vector<32x256xf32>
    %cst_8 = arith.constant dense<0.000000e+00> : vector<32x256xf32>
    %16 = tpu.matmul %14, %15, %cst_8 {dimension_numbers = #tpu.dot_dimension_numbers<[1], [0], [0], [1], [0, 0, 1, 1], [], []>} : vector<32x32xf32>, vector<32x256xf32>, vector<32x256xf32> -> vector<32x256xf32>
    %c0_9 = arith.constant 0 : index
    %c0_10 = arith.constant 0 : index
    %17 = vector.load %arg5[%c0_9, %c0_10] : memref<32x16xf32, #tpu.memory_space<vmem>>, vector<32x16xf32>
    %cst_11 = arith.constant dense<0.000000e+00> : vector<32x256xf32>
    %18 = tpu.matmul %17, %13, %cst_11 {dimension_numbers = #tpu.dot_dimension_numbers<[1], [0], [0], [1], [0, 0, 1, 1], [], []>} : vector<32x16xf32>, vector<16x256xf32>, vector<32x256xf32> -> vector<32x256xf32>
    %19 = arith.addf %16, %18 : vector<32x256xf32>
    %c0_12 = arith.constant 0 : index
    %c0_13 = arith.constant 0 : index
    %20 = vector.load %arg6[%c0_12, %c0_13] : memref<32x1xf32, #tpu.memory_space<vmem>>, vector<32x1xf32>
    %21 = vector.broadcast %20 : vector<32x1xf32> to vector<32x256xf32>
    %22 = arith.addf %19, %21 : vector<32x256xf32>
    %cst_14 = arith.constant 0.000000e+00 : f32
    %cst_15 = arith.constant 6.000000e+00 : f32
    %23 = vector.broadcast %cst_14 : f32 to vector<32x256xf32>
    %24 = arith.maximumf %23, %22 : vector<32x256xf32>
    %25 = vector.broadcast %cst_15 : f32 to vector<32x256xf32>
    %26 = arith.minimumf %25, %24 : vector<32x256xf32>
    %c0_16 = arith.constant 0 : index
    %c0_17 = arith.constant 0 : index
    %27 = vector.load %arg7[%c0_16, %c0_17] : memref<32x256xf32, #tpu.memory_space<vmem>>, vector<32x256xf32>
    tpu.vector_store %arg7[%c0_16, %c0_17], %26 {strides = array<i32>} : memref<32x256xf32, #tpu.memory_space<vmem>>, vector<32x256xf32>,
    %28 = vector.extract_strided_slice %2 {offsets = [48, 0], sizes = [16, 256], strides = [1, 1]} : vector<96x256xf32> to vector<16x256xf32>
    %29 = vector.extract_strided_slice %2 {offsets = [64, 0], sizes = [16, 256], strides = [1, 1]} : vector<96x256xf32> to vector<16x256xf32>
    %30 = vector.extract_strided_slice %2 {offsets = [80, 0], sizes = [16, 256], strides = [1, 1]} : vector<96x256xf32> to vector<16x256xf32>
    %31 = arith.mulf %28, %28 : vector<16x256xf32>
    %32 = arith.mulf %29, %29 : vector<16x256xf32>
    %33 = arith.addf %31, %32 : vector<16x256xf32>
    %34 = arith.mulf %30, %30 : vector<16x256xf32>
    %35 = arith.addf %33, %34 : vector<16x256xf32>
    %cst_18 = arith.constant 9.99999993E-9 : f32
    %36 = vector.broadcast %cst_18 : f32 to vector<16x256xf32>
    %37 = arith.maximumf %35, %36 : vector<16x256xf32>
    %38 = math.sqrt %37 : vector<16x256xf32>
    %39 = arith.negf %38 : vector<16x256xf32>
    %40 = math.exp %39 : vector<16x256xf32>
    %cst_19 = arith.constant 1.000000e+00 : f32
    %41 = vector.broadcast %cst_19 : f32 to vector<16x256xf32>
    %42 = arith.addf %41, %40 : vector<16x256xf32>
    %43 = arith.divf %41, %42 : vector<16x256xf32>
    %44 = arith.mulf %28, %43 : vector<16x256xf32>
    %c0_20 = arith.constant 0 : index
    %c0_21 = arith.constant 0 : index
    %45 = vector.load %arg8[%c0_20, %c0_21] : memref<48x256xf32, #tpu.memory_space<vmem>>, vector<16x256xf32>
    tpu.vector_store %arg8[%c0_20, %c0_21], %44 {strides = array<i32>} : memref<48x256xf32, #tpu.memory_space<vmem>>, vector<16x256xf32>,
    %46 = arith.mulf %29, %43 : vector<16x256xf32>
    %c16 = arith.constant 16 : index
    %c0_22 = arith.constant 0 : index
    %47 = vector.load %arg8[%c16, %c0_22] : memref<48x256xf32, #tpu.memory_space<vmem>>, vector<16x256xf32>
    tpu.vector_store %arg8[%c16, %c0_22], %46 {strides = array<i32>} : memref<48x256xf32, #tpu.memory_space<vmem>>, vector<16x256xf32>,
    %48 = arith.mulf %30, %43 : vector<16x256xf32>
    %c32 = arith.constant 32 : index
    %c0_23 = arith.constant 0 : index
    %49 = vector.load %arg8[%c32, %c0_23] : memref<48x256xf32, #tpu.memory_space<vmem>>, vector<16x256xf32>
    tpu.vector_store %arg8[%c32, %c0_23], %48 {strides = array<i32>} : memref<48x256xf32, #tpu.memory_space<vmem>>, vector<16x256xf32>,
    return
  }
  func.func @transform_0(%arg0: i32) -> (i32, i32) {
    %c0_i32 = arith.constant 0 : i32
    %c0_i32_0 = arith.constant 0 : i32
    return %c0_i32, %arg0 : i32, i32
  }
  func.func @transform_1(%arg0: i32) -> (i32, i32) {
    %c0_i32 = arith.constant 0 : i32
    %c0_i32_0 = arith.constant 0 : i32
    return %c0_i32, %arg0 : i32, i32
  }
  func.func @transform_2(%arg0: i32) -> (i32, i32) {
    %c0_i32 = arith.constant 0 : i32
    %c0_i32_0 = arith.constant 0 : i32
    %c0_i32_1 = arith.constant 0 : i32
    return %c0_i32, %c0_i32_0 : i32, i32
  }
  func.func @transform_3(%arg0: i32) -> (i32, i32) {
    %c0_i32 = arith.constant 0 : i32
    %c0_i32_0 = arith.constant 0 : i32
    %c0_i32_1 = arith.constant 0 : i32
    return %c0_i32, %c0_i32_0 : i32, i32
  }
  func.func @transform_4(%arg0: i32) -> (i32, i32) {
    %c0_i32 = arith.constant 0 : i32
    %c0_i32_0 = arith.constant 0 : i32
    %c0_i32_1 = arith.constant 0 : i32
    return %c0_i32, %c0_i32_0 : i32, i32
  }
  func.func @transform_5(%arg0: i32) -> (i32, i32) {
    %c0_i32 = arith.constant 0 : i32
    %c0_i32_0 = arith.constant 0 : i32
    %c0_i32_1 = arith.constant 0 : i32
    return %c0_i32, %c0_i32_0 : i32, i32
  }
  func.func @transform_6(%arg0: i32) -> (i32, i32) {
    %c0_i32 = arith.constant 0 : i32
    %c0_i32_0 = arith.constant 0 : i32
    return %c0_i32, %arg0 : i32, i32
  }
  func.func @transform_7(%arg0: i32) -> (i32, i32) {
    %c0_i32 = arith.constant 0 : i32
    %c0_i32_0 = arith.constant 0 : i32
    return %c0_i32, %arg0 : i32, i32
  }
}

</mosaic_0001>

<llo_original>
// kernel: tpu_custom_call.1
$region0: #{tpu_custom_call.1}
  #allocation0 [shape = 'u32[]', space=smem, size = 0x4, offset = 0x4, fixed_abs, tag = 'smem constant byte address 0x4 - core index']
  #allocation1 [shape = 'u32[144,128]{1,0:T(1,128)}', space=vmem, size = 0x12000, scoped, tag = 'internal scratch']
  %s0 = inlined_call_operand.hbm [shape: f32[32,512], index: 0, kind: input, shape index: {}]
  %s1 = inlined_call_operand.vmem [shape: f32[48,512], index: 1, kind: input, shape index: {}]
  %s2 = inlined_call_operand.vmem [shape: f32[96,48], index: 2, kind: input, shape index: {}]
  %s3 = inlined_call_operand.vmem [shape: f32[32,32], index: 3, kind: input, shape index: {}]
  %s4 = inlined_call_operand.vmem [shape: f32[32,16], index: 4, kind: input, shape index: {}]
  %s5 = inlined_call_operand.vmem [shape: f32[32,1], index: 5, kind: input, shape index: {}]
  %s6 = inlined_call_operand.hbm [shape: f32[32,512], index: 6, kind: output, shape index: {0}]
  %s7 = inlined_call_operand.hbm [shape: f32[48,512], index: 7, kind: output, shape index: {1}]
  %8 = xla_tuple %s6, %s7
  %s9 = sld [smem:[#allocation0]]
  $region92: #{tpu_custom_call.1} parent=0
    _
  %s11 = ssub.s32 1, %s9
  %s12 = scalar_select 0, %s11, %s9
  $region1: #{tpu_custom_call.1} parent=0
    #allocation2 [shape = 'u8[65536]{0}', space=vmem, size = 0x10000, scoped, tag = 'input window, operand 0']
    #allocation3 [shape = 's32[2]{0}', space=sflag, size = 0x8, scoped, tag = 'scoped memory for tpu_custom_call.1']
    #allocation4 [shape = 's32[2]{0}', space=sflag, size = 0x8, scoped, tag = 'scoped memory for tpu_custom_call.1']
    #allocation5 [shape = 'u8[98304]{0}', space=vmem, size = 0x18000, scoped, tag = 'input window, operand 1']
    #allocation6 [shape = 'u8[65536]{0}', space=vmem, size = 0x10000, scoped, tag = 'output window, operand 0']
    #allocation7 [shape = 'u8[98304]{0}', space=vmem, size = 0x18000, scoped, tag = 'output window, operand 1']
    #allocation8 [shape = 's32[2]{0}', space=sflag, size = 0x8, scoped, tag = 'scoped memory for tpu_custom_call.1']
    %13 = vsyncpa [#allocation3], 0
    %s14 = scalar_lea.sflag [#allocation3], 1
    %15 = vsyncpa %s14, 0
    %16 = vsyncpa [#allocation4], 0
    %s17 = scalar_lea.sflag [#allocation4], 1
    %18 = vsyncpa %s17, 0
    %19 = vsyncpa [#allocation8], 0
    %s20 = scalar_lea.sflag [#allocation8], 1
    %21 = vsyncpa %s20, 0
    loop: start=0, step=1, limit=4
    $region2: #{tpu_custom_call.1} parent=1 // loop_pre_header
      _
    $region3: #{tpu_custom_call.1} parent=1 // loop_header
      %s23 = sphi 0, %s27
      %p24 = scmp.ge.s32.totalorder %s23, 4
      %s33 = sphi 0, %s35
      %s36 = sphi 0, %s33
      %s37 = sphi 0, %s36
      %s53 = sphi 0, %s37
      %s59 = sphi 0, %s61
      %s62 = sphi 0, %s59
      %s63 = sphi 0, %s62
      %s79 = sphi 0, %s63
      %s83 = sphi 0, %s83
      %s85 = sphi 0, %s83
      %s86 = sphi 0, %s85
      %s100 = sphi 0, %s86
      %s104 = sphi 0, %s104
      %s106 = sphi 0, %s104
      %s107 = sphi 0, %s106
      %s121 = sphi 0, %s107
      %s125 = sphi 0, %s125
      %s127 = sphi 0, %s125
      %s128 = sphi 0, %s127
      %s142 = sphi 0, %s128
      %s146 = sphi 0, %s146
      %s148 = sphi 0, %s146
      %s149 = sphi 0, %s148
      %s163 = sphi 0, %s149
      %s169 = sphi 0, %s171
      %s172 = sphi 0, %s169
      %s173 = sphi 0, %s172
      %s189 = sphi 0, %s173
      %s195 = sphi 0, %s197
      %s198 = sphi 0, %s195
      %s199 = sphi 0, %s198
      %s215 = sphi 0, %s199
    $region4: #{tpu_custom_call.1} parent=1 // loop_header_branch
      %26 = sbr.rel (%p24) target = $region8
    $region5: #{tpu_custom_call.1} parent=1 // loop_body
      %s28 = ssub.s32 %s23, 1
      %s29 = ssub.s32 %s23, 2
      %s30 = sadd.s32 %s23, 1
      %s31 = ssub.s32 %s23, %s30
      %p32 = scmp.eq.s32.totalorder %s31, 0
      %s34 = sadd.s32 %s33, 1
      %s35 = scalar_select %p32, %s33, %s34
      %p38 = pneg %p32
      %p39 = scmp.eq.s32.totalorder %s23, 1
      %p40 = por %p38, %p39
      %p41 = scmp.ne.s32.totalorder %s33, %s36
      %p42 = scmp.eq.s32.totalorder %s23, 0
      %p43 = por %p41, %p42
      %p44 = scmp.ne.s32.totalorder %s33, %s36
      %p45 = scmp.eq.s32.totalorder %s28, 1
      %p46 = por %p44, %p45
      %p47 = scmp.ne.s32.totalorder %s36, %s37
      %p48 = scmp.eq.s32.totalorder %s28, 0
      %p49 = por %p47, %p48
      %p50 = scmp.ne.s32.totalorder %s36, %s37
      %p51 = scmp.eq.s32.totalorder %s29, 1
      %p52 = por %p50, %p51
      %p54 = scmp.ne.s32.totalorder %s37, %s53
      %p55 = scmp.eq.s32.totalorder %s29, 0
      %p56 = por %p54, %p55
      %s57 = ssub.s32 %s23, %s30
      %p58 = scmp.eq.s32.totalorder %s57, 0
      %s60 = sadd.s32 %s59, 1
      %s61 = scalar_select %p58, %s59, %s60
      %p64 = pneg %p58
      %p65 = scmp.eq.s32.totalorder %s23, 1
      %p66 = por %p64, %p65
      %p67 = scmp.ne.s32.totalorder %s59, %s62
      %p68 = scmp.eq.s32.totalorder %s23, 0
      %p69 = por %p67, %p68
      %p70 = scmp.ne.s32.totalorder %s59, %s62
      %p71 = scmp.eq.s32.totalorder %s28, 1
      %p72 = por %p70, %p71
      %p73 = scmp.ne.s32.totalorder %s62, %s63
      %p74 = scmp.eq.s32.totalorder %s28, 0
      %p75 = por %p73, %p74
      %p76 = scmp.ne.s32.totalorder %s62, %s63
      %p77 = scmp.eq.s32.totalorder %s29, 1
      %p78 = por %p76, %p77
      %p80 = scmp.ne.s32.totalorder %s63, %s79
      %p81 = scmp.eq.s32.totalorder %s29, 0
      %p82 = por %p80, %p81
      %s84 = sadd.s32 %s83, 1
      %p87 = scmp.eq.s32.totalorder %s23, 1
      %p88 = scmp.ne.s32.totalorder %s83, %s85
      %p89 = scmp.eq.s32.totalorder %s23, 0
      %p90 = por %p88, %p89
      %p91 = scmp.ne.s32.totalorder %s83, %s85
      %p92 = scmp.eq.s32.totalorder %s28, 1
      %p93 = por %p91, %p92
      %p94 = scmp.ne.s32.totalorder %s85, %s86
      %p95 = scmp.eq.s32.totalorder %s28, 0
      %p96 = por %p94, %p95
      %p97 = scmp.ne.s32.totalorder %s85, %s86
      %p98 = scmp.eq.s32.totalorder %s29, 1
      %p99 = por %p97, %p98
      %p101 = scmp.ne.s32.totalorder %s86, %s100
      %p102 = scmp.eq.s32.totalorder %s29, 0
      %p103 = por %p101, %p102
      %s105 = sadd.s32 %s104, 1
      %p108 = scmp.eq.s32.totalorder %s23, 1
      %p109 = scmp.ne.s32.totalorder %s104, %s106
      %p110 = scmp.eq.s32.totalorder %s23, 0
      %p111 = por %p109, %p110
      %p112 = scmp.ne.s32.totalorder %s104, %s106
      %p113 = scmp.eq.s32.totalorder %s28, 1
      %p114 = por %p112, %p113
      %p115 = scmp.ne.s32.totalorder %s106, %s107
      %p116 = scmp.eq.s32.totalorder %s28, 0
      %p117 = por %p115, %p116
      %p118 = scmp.ne.s32.totalorder %s106, %s107
      %p119 = scmp.eq.s32.totalorder %s29, 1
      %p120 = por %p118, %p119
      %p122 = scmp.ne.s32.totalorder %s107, %s121
      %p123 = scmp.eq.s32.totalorder %s29, 0
      %p124 = por %p122, %p123
      %s126 = sadd.s32 %s125, 1
      %p129 = scmp.eq.s32.totalorder %s23, 1
      %p130 = scmp.ne.s32.totalorder %s125, %s127
      %p131 = scmp.eq.s32.totalorder %s23, 0
      %p132 = por %p130, %p131
      %p133 = scmp.ne.s32.totalorder %s125, %s127
      %p134 = scmp.eq.s32.totalorder %s28, 1
      %p135 = por %p133, %p134
      %p136 = scmp.ne.s32.totalorder %s127, %s128
      %p137 = scmp.eq.s32.totalorder %s28, 0
      %p138 = por %p136, %p137
      %p139 = scmp.ne.s32.totalorder %s127, %s128
      %p140 = scmp.eq.s32.totalorder %s29, 1
      %p141 = por %p139, %p140
      %p143 = scmp.ne.s32.totalorder %s128, %s142
      %p144 = scmp.eq.s32.totalorder %s29, 0
      %p145 = por %p143, %p144
      %s147 = sadd.s32 %s146, 1
      %p150 = scmp.eq.s32.totalorder %s23, 1
      %p151 = scmp.ne.s32.totalorder %s146, %s148
      %p152 = scmp.eq.s32.totalorder %s23, 0
      %p153 = por %p151, %p152
      %p154 = scmp.ne.s32.totalorder %s146, %s148
      %p155 = scmp.eq.s32.totalorder %s28, 1
      %p156 = por %p154, %p155
      %p157 = scmp.ne.s32.totalorder %s148, %s149
      %p158 = scmp.eq.s32.totalorder %s28, 0
      %p159 = por %p157, %p158
      %p160 = scmp.ne.s32.totalorder %s148, %s149
      %p161 = scmp.eq.s32.totalorder %s29, 1
      %p162 = por %p160, %p161
      %p164 = scmp.ne.s32.totalorder %s149, %s163
      %p165 = scmp.eq.s32.totalorder %s29, 0
      %p166 = por %p164, %p165
      %s167 = ssub.s32 %s23, %s30
      %p168 = scmp.eq.s32.totalorder %s167, 0
      %s170 = sadd.s32 %s169, 1
      %s171 = scalar_select %p168, %s169, %s170
      %p174 = pneg %p168
      %p175 = scmp.eq.s32.totalorder %s23, 1
      %p176 = por %p174, %p175
      %p177 = scmp.ne.s32.totalorder %s169, %s172
      %p178 = scmp.eq.s32.totalorder %s23, 0
      %p179 = por %p177, %p178
      %p180 = scmp.ne.s32.totalorder %s169, %s172
      %p181 = scmp.eq.s32.totalorder %s28, 1
      %p182 = por %p180, %p181
      %p183 = scmp.ne.s32.totalorder %s172, %s173
      %p184 = scmp.eq.s32.totalorder %s28, 0
      %p185 = por %p183, %p184
      %p186 = scmp.ne.s32.totalorder %s172, %s173
      %p187 = scmp.eq.s32.totalorder %s29, 1
      %p188 = por %p186, %p187
      %p190 = scmp.ne.s32.totalorder %s173, %s189
      %p191 = scmp.eq.s32.totalorder %s29, 0
      %p192 = por %p190, %p191
      %s193 = ssub.s32 %s23, %s30
      %p194 = scmp.eq.s32.totalorder %s193, 0
      %s196 = sadd.s32 %s195, 1
      %s197 = scalar_select %p194, %s195, %s196
      %p200 = pneg %p194
      %p201 = scmp.eq.s32.totalorder %s23, 1
      %p202 = por %p200, %p201
      %p203 = scmp.ne.s32.totalorder %s195, %s198
      %p204 = scmp.eq.s32.totalorder %s23, 0
      %p205 = por %p203, %p204
      %p206 = scmp.ne.s32.totalorder %s195, %s198
      %p207 = scmp.eq.s32.totalorder %s28, 1
      %p208 = por %p206, %p207
      %p209 = scmp.ne.s32.totalorder %s198, %s199
      %p210 = scmp.eq.s32.totalorder %s28, 0
      %p211 = por %p209, %p210
      %p212 = scmp.ne.s32.totalorder %s198, %s199
      %p213 = scmp.eq.s32.totalorder %s29, 1
      %p214 = por %p212, %p213
      %p216 = scmp.ne.s32.totalorder %s199, %s215
      %p217 = scmp.eq.s32.totalorder %s29, 0
      %p218 = por %p216, %p217
      %p219 = scmp.le.s32.totalorder 1, %s23
      %p220 = scmp.lt.s32.totalorder %s23, 3
      %p221 = pnand %p219, %p220
      %p222 = pneg %p221
      // Predicated region
      $region9: #{tpu_custom_call.1} parent=5 // pred_check
        _
      $region10: #{tpu_custom_call.1} parent=5 // pred_check_branch
        %224 = sbr.rel (%p221) target = $region12
      $region11: #{tpu_custom_call.1} parent=5 // pred_region
        %s225 = ssub.s32 %s23, 1
        // Predicated region
        $region13: #{tpu_custom_call.1} parent=11 // pred_check
          %p226 = pneg %p96
        $region14: #{tpu_custom_call.1} parent=11 // pred_check_branch
          %228 = sbr.rel (%p226) target = $region16
        $region15: #{tpu_custom_call.1} parent=11 // pred_region
          _
        $region16: #{tpu_custom_call.1} parent=11 // pred_fallthru
          _
        // Predicated region
        $region17: #{tpu_custom_call.1} parent=11 // pred_check
          %p229 = pneg %p117
        $region18: #{tpu_custom_call.1} parent=11 // pred_check_branch
          %231 = sbr.rel (%p229) target = $region20
        $region19: #{tpu_custom_call.1} parent=11 // pred_region
          _
        $region20: #{tpu_custom_call.1} parent=11 // pred_fallthru
          _
        // Predicated region
        $region21: #{tpu_custom_call.1} parent=11 // pred_check
          %p232 = pneg %p138
        $region22: #{tpu_custom_call.1} parent=11 // pred_check_branch
          %234 = sbr.rel (%p232) target = $region24
        $region23: #{tpu_custom_call.1} parent=11 // pred_region
          _
        $region24: #{tpu_custom_call.1} parent=11 // pred_fallthru
          _
        // Predicated region
        $region25: #{tpu_custom_call.1} parent=11 // pred_check
          %p235 = pneg %p159
        $region26: #{tpu_custom_call.1} parent=11 // pred_check_branch
          %237 = sbr.rel (%p235) target = $region28
        $region27: #{tpu_custom_call.1} parent=11 // pred_region
          _
        $region28: #{tpu_custom_call.1} parent=11 // pred_fallthru
          _
      $region12: #{tpu_custom_call.1} parent=5 // pred_fallthru
        _
      %p238 = scmp.lt.s32.totalorder %s23, 2
      // Predicated region
      $region29: #{tpu_custom_call.1} parent=5 // pred_check
        %p239 = pneg %p238
      $region30: #{tpu_custom_call.1} parent=5 // pred_check_branch
        %241 = sbr.rel (%p239) target = $region32
      $region31: #{tpu_custom_call.1} parent=5 // pred_region
        // Predicated region
        $region33: #{tpu_custom_call.1} parent=31 // pred_check
          %p242 = pneg %p43
        $region34: #{tpu_custom_call.1} parent=31 // pred_check_branch
          %244 = sbr.rel (%p242) target = $region36
        $region35: #{tpu_custom_call.1} parent=31 // pred_region
          %s245 = sand.u32 %s33, 1
          %s246 = scalar_lea.sflag [#allocation3], %s245
          %s247 = sand.u32 %s33, 1
          %s248 = smul.addr %s247, 64
          %s249 = scalar_lea.vmem [#allocation2], %s248
          %s250 = smul.u32 2, %s23
          %s252 = ssub.s32 1024, 1024
          %253 = vsyncadd %s246, %s252
          %s254 = smul.addr %s250, 128
          %s255 = scalar_lea.hbm %s0, %s254
          %s256 = sshll.u32 %s249, 4
          %s257 = int_to_ptr.vmem [resolvable:$true] %s256
          %262 = dma.hbm_to_vmem [thread:$0]  %s255, 1024, %s257, %s246, 512, 256, 16
        $region36: #{tpu_custom_call.1} parent=31 // pred_fallthru
          _
        // Predicated region
        $region37: #{tpu_custom_call.1} parent=31 // pred_check
          %p263 = pneg %p69
        $region38: #{tpu_custom_call.1} parent=31 // pred_check_branch
          %265 = sbr.rel (%p263) target = $region40
        $region39: #{tpu_custom_call.1} parent=31 // pred_region
          %s266 = sand.u32 %s59, 1
          %s267 = sand.u32 %s59, 1
          %s268 = smul.addr %s267, 96
          %s269 = scalar_lea.vmem [#allocation5], %s268
          %s270 = smul.u32 2, %s23
          %s271 = smul.addr %s270, 8
          %s272 = scalar_lea.vmem %s1, %s271
          // Predicated region
          $region41: #{tpu_custom_call.1} parent=39 // pred_check
            _
          $region42: #{tpu_custom_call.1} parent=39 // pred_check_branch
            %274 = sbr.rel (0) target = $region44
          $region43: #{tpu_custom_call.1} parent=39 // pred_region
            // Predicated region
            $region45: #{tpu_custom_call.1} parent=43 // pred_check
              _
            $region46: #{tpu_custom_call.1} parent=43 // pred_check_branch
              %276 = sbr.rel (0) target = $region48
            $region47: #{tpu_custom_call.1} parent=43 // pred_region
              loop: start=0, step=1, limit=1
              $region49: #{tpu_custom_call.1} parent=47 // loop_pre_header
                _
              $region50: #{tpu_custom_call.1} parent=47 // loop_header
                %s278 = sphi 0, %s282
                %p279 = scmp.ge.s32.totalorder %s278, 1
                %s283 = sphi %s272, %s272
                %s284 = sphi %s269, %s269
              $region51: #{tpu_custom_call.1} parent=47 // loop_header_branch
                %281 = sbr.rel (%p279) target = $region55
              $region52: #{tpu_custom_call.1} parent=47 // loop_body
                %v285 = vld [vmem:[%s283] sm:$0xff]
                %286 = vst [vmem:[%s284] sm:$0xff] %v285
                %v287 = vld [vmem:[%s283 + $0x8] sm:$0xff]
                %288 = vst [vmem:[%s284 + $0x8] sm:$0xff] %v287
                %v289 = vld [vmem:[%s283 + $0x20] sm:$0xff]
                %290 = vst [vmem:[%s284 + $0x10] sm:$0xff] %v289
                %v291 = vld [vmem:[%s283 + $0x28] sm:$0xff]
                %292 = vst [vmem:[%s284 + $0x18] sm:$0xff] %v291
                %v293 = vld [vmem:[%s283 + $0x40] sm:$0xff]
                %294 = vst [vmem:[%s284 + $0x20] sm:$0xff] %v293
                %v295 = vld [vmem:[%s283 + $0x48] sm:$0xff]
                %296 = vst [vmem:[%s284 + $0x28] sm:$0xff] %v295
                %v297 = vld [vmem:[%s283 + $0x60] sm:$0xff]
                %298 = vst [vmem:[%s284 + $0x30] sm:$0xff] %v297
                %v299 = vld [vmem:[%s283 + $0x68] sm:$0xff]
                %300 = vst [vmem:[%s284 + $0x38] sm:$0xff] %v299
                %v301 = vld [vmem:[%s283 + $0x80] sm:$0xff]
                %302 = vst [vmem:[%s284 + $0x40] sm:$0xff] %v301
                %v303 = vld [vmem:[%s283 + $0x88] sm:$0xff]
                %304 = vst [vmem:[%s284 + $0x48] sm:$0xff] %v303
                %v305 = vld [vmem:[%s283 + $0xa0] sm:$0xff]
                %306 = vst [vmem:[%s284 + $0x50] sm:$0xff] %v305
                %v307 = vld [vmem:[%s283 + $0xa8] sm:$0xff]
                %308 = vst [vmem:[%s284 + $0x58] sm:$0xff] %v307
              $region53: #{tpu_custom_call.1} parent=47 // loop_footer
                %s282 = sadd.s32 1, %s278
              $region54: #{tpu_custom_call.1} parent=47 // loop_footer_branch
                %277 = sbr.rel target = $region50
              $region55: #{tpu_custom_call.1} parent=47 // loop_exit
                _
            $region48: #{tpu_custom_call.1} parent=43 // pred_fallthru
              _
            // Predicated region
            $region56: #{tpu_custom_call.1} parent=43 // pred_check
              _
            $region57: #{tpu_custom_call.1} parent=43 // pred_check_branch
              %310 = sbr.rel target = $region59
            $region58: #{tpu_custom_call.1} parent=43 // pred_region
              _
            $region59: #{tpu_custom_call.1} parent=43 // pred_fallthru
              _
          $region44: #{tpu_custom_call.1} parent=39 // pred_fallthru
            _
          %311 = vnop
        $region40: #{tpu_custom_call.1} parent=31 // pred_fallthru
          _
      $region32: #{tpu_custom_call.1} parent=5 // pred_fallthru
        _
      %p312 = scmp.le.s32.totalorder 1, %s23
      %p313 = scmp.lt.s32.totalorder %s23, 3
      %p314 = pnand %p312, %p313
      %p315 = pneg %p314
      // Predicated region
      $region60: #{tpu_custom_call.1} parent=5 // pred_check
        _
      $region61: #{tpu_custom_call.1} parent=5 // pred_check_branch
        %317 = sbr.rel (%p314) target = $region63
      $region62: #{tpu_custom_call.1} parent=5 // pred_region
        %s318 = ssub.s32 %s23, 1
        %s319 = sand.u32 %s36, 1
        %s320 = scalar_lea.sflag [#allocation3], %s319
        %s321 = sand.u32 %s36, 1
        %s322 = smul.addr %s321, 64
        %s323 = scalar_lea.vmem [#allocation2], %s322
        // Predicated region
        $region64: #{tpu_custom_call.1} parent=62 // pred_check
          %p324 = pneg %p49
        $region65: #{tpu_custom_call.1} parent=62 // pred_check_branch
          %326 = sbr.rel (%p324) target = $region67
        $region66: #{tpu_custom_call.1} parent=62 // pred_region
          %327 = dma.done %s320, 1024
        $region67: #{tpu_custom_call.1} parent=62 // pred_fallthru
          _
        %s328 = sand.u32 %s62, 1
        %s329 = sand.u32 %s62, 1
        %s330 = smul.addr %s329, 96
        %s331 = scalar_lea.vmem [#allocation5], %s330
        // Predicated region
        $region68: #{tpu_custom_call.1} parent=62 // pred_check
          %p332 = pneg %p75
        $region69: #{tpu_custom_call.1} parent=62 // pred_check_branch
          %334 = sbr.rel (%p332) target = $region71
        $region70: #{tpu_custom_call.1} parent=62 // pred_region
          _
        $region71: #{tpu_custom_call.1} parent=62 // pred_fallthru
          _
        %s335 = sand.u32 %s36, 1
        %s336 = scalar_lea.sflag [#allocation3], %s335
        %s337 = sand.u32 %s36, 1
        %s338 = smul.addr %s337, 64
        %s339 = scalar_lea.vmem [#allocation2], %s338
        %p340 = pneg %p49
        %p341 = pneg %p46
        %s342 = sand.u32 %s62, 1
        %s343 = sand.u32 %s62, 1
        %s344 = smul.addr %s343, 96
        %s345 = scalar_lea.vmem [#allocation5], %s344
        %p346 = pneg %p75
        %p347 = pneg %p72
        %p348 = pneg %p96
        %p349 = pneg %p93
        %p350 = pneg %p117
        %p351 = pneg %p114
        %p352 = pneg %p138
        %p353 = pneg %p135
        %p354 = pneg %p159
        %p355 = pneg %p156
        %p356 = pneg %p185
        %p357 = pneg %p182
        %s358 = sand.u32 %s172, 1
        %s359 = scalar_lea.sflag [#allocation4], %s358
        %s360 = sand.u32 %s172, 1
        %s361 = smul.addr %s360, 64
        %s362 = scalar_lea.vmem [#allocation6], %s361
        %p363 = pneg %p211
        %p364 = pneg %p208
        %s365 = sand.u32 %s198, 1
        %s366 = scalar_lea.sflag [#allocation8], %s365
        %s367 = sand.u32 %s198, 1
        %s368 = smul.addr %s367, 96
        %s369 = scalar_lea.vmem [#allocation7], %s368
        %s370 = smul.u32 2, %s28
        %s371 = smul.u32 2, %s28
        %s372 = smul.u32 2, %s28
        %s373 = smul.u32 2, %s28
        %v374 = vld [vmem:[%s2] sm:$0xff]
        %v375 = vld [vmem:[%s2 + $0x8] sm:$0xff]
        %v376 = vld [vmem:[%s2 + $0x10] sm:$0xff]
        %v377 = vld [vmem:[%s2 + $0x18] sm:$0xff]
        %v378 = vld [vmem:[%s2 + $0x20] sm:$0xff]
        %v379 = vld [vmem:[%s2 + $0x28] sm:$0xff]
        %v380 = vld [vmem:[%s2 + $0x30] sm:$0xff]
        %v381 = vld [vmem:[%s2 + $0x38] sm:$0xff]
        %v382 = vld [vmem:[%s2 + $0x40] sm:$0xff]
        %v383 = vld [vmem:[%s2 + $0x48] sm:$0xff]
        %v384 = vld [vmem:[%s2 + $0x50] sm:$0xff]
        %v385 = vld [vmem:[%s2 + $0x58] sm:$0xff]
        %v386 = vld [vmem:[%s331] sm:$0xff]
        %v387 = vld [vmem:[%s331 + $0x8] sm:$0xff]
        %v388 = vld [vmem:[%s331 + $0x10] sm:$0xff]
        %v389 = vld [vmem:[%s331 + $0x18] sm:$0xff]
        %v390 = vld [vmem:[%s331 + $0x20] sm:$0xff]
        %v391 = vld [vmem:[%s331 + $0x28] sm:$0xff]
        %v392 = vld [vmem:[%s331 + $0x30] sm:$0xff]
        %v393 = vld [vmem:[%s331 + $0x38] sm:$0xff]
        %v394 = vld [vmem:[%s331 + $0x40] sm:$0xff]
        %v395 = vld [vmem:[%s331 + $0x48] sm:$0xff]
        %v396 = vld [vmem:[%s331 + $0x50] sm:$0xff]
        %v397 = vld [vmem:[%s331 + $0x58] sm:$0xff]
        %vm398 = vcmask 392192
        %v400 = vsel %vm398, %v374, 0
        %v403 = vsel %vm398, %v375, 0
        %v406 = vsel %vm398, %v376, 0
        %v409 = vsel %vm398, %v377, 0
        %v412 = vsel %vm398, %v378, 0
        %v415 = vsel %vm398, %v379, 0
        %v418 = vsel %vm398, %v380, 0
        %v421 = vsel %vm398, %v381, 0
        %v424 = vsel %vm398, %v382, 0
        %v427 = vsel %vm398, %v383, 0
        %v430 = vsel %vm398, %v384, 0
        %v433 = vsel %vm398, %v385, 0
        %435 = vmatprep.subr.mxu0 %v387
        %436 = vmatpush1.msra.mxu0 %v386
        %437 = vmatprep.subr.mxu0 %v389
        %438 = vmatpush1.msra.mxu0 %v388
        %439 = vmatprep.subr.mxu0 %v391
        %440 = vmatpush1.msra.mxu0 %v390
        %441 = vmatprep.subr.mxu0 %v393
        %442 = vmatpush1.msra.mxu0 %v392
        %443 = vmatprep.subr.mxu0 %v395
        %444 = vmatpush1.msra.mxu0 %v394
        %445 = vmatprep.subr.mxu0 %v397
        %446 = vmatpush1.msra.mxu0 %v396
        %447 = vmatprep.subr.mxu0 0.0
        %448 = vmatpush1.msra.mxu0 0.0
        %449 = vmatprep.subr.mxu0 0.0
        %450 = vmatpush1.msra.mxu0 0.0
        %451 = vmatprep.subr.mxu0 0.0
        %452 = vmatpush1.msra.mxu0 0.0
        %453 = vmatprep.subr.mxu0 0.0
        %454 = vmatpush1.msra.mxu0 0.0
        %455 = vmatprep.subr.mxu0 0.0
        %456 = vmatpush1.msra.mxu0 0.0
        %457 = vmatprep.subr.mxu0 0.0
        %458 = vmatpush1.msra.mxu0 0.0
        %459 = vmatprep.subr.mxu0 0.0
        %460 = vmatpush1.msra.mxu0 0.0
        %461 = vmatprep.subr.mxu0 0.0
        %462 = vmatpush1.msra.mxu0 0.0
        %463 = vmatprep.subr.mxu0 0.0
        %464 = vmatpush1.msra.mxu0 0.0
        %465 = vmatprep.subr.mxu0 0.0
        %466 = vmatpush1.msra.mxu0 0.0
        %467 = vmatprep.subr.mxu0 0.0
        %468 = vmatpush1.msra.mxu0 0.0
        %469 = vmatprep.subr.mxu0 0.0
        %470 = vmatpush1.msra.mxu0 0.0
        %471 = vmatprep.subr.mxu0 0.0
        %472 = vmatpush1.msra.mxu0 0.0
        %473 = vmatprep.subr.mxu0 0.0
        %474 = vmatpush1.msra.mxu0 0.0
        %475 = vmatprep.subr.mxu0 0.0
        %476 = vmatpush1.msra.mxu0 0.0
        %477 = vmatprep.subr.mxu0 0.0
        %478 = vmatpush1.msra.mxu0 0.0
        %479 = vmatprep.subr.mxu0 0.0
        %480 = vmatpush1.msra.mxu0 0.0
        %481 = vmatprep.subr.mxu0 0.0
        %482 = vmatpush1.msra.mxu0 0.0
        %483 = vmatprep.subr.mxu0 0.0
        %484 = vmatpush1.msra.mxu0 0.0
        %485 = vmatprep.subr.mxu0 0.0
        %486 = vmatpush1.msra.mxu0 0.0
        %487 = vmatprep.subr.mxu0 0.0
        %488 = vmatpush1.msra.mxu0 0.0
        %489 = vmatprep.subr.mxu0 0.0
        %490 = vmatpush1.msra.mxu0 0.0
        %491 = vmatprep.subr.mxu0 0.0
        %492 = vmatpush1.msra.mxu0 0.0
        %493 = vmatprep.subr.mxu0 0.0
        %494 = vmatpush1.msra.mxu0 0.0
        %495 = vmatprep.subr.mxu0 0.0
        %496 = vmatpush1.msra.mxu0 0.0
        %497 = vmatprep.subr.mxu0 0.0
        %498 = vmatpush1.msra.mxu0 0.0
        %499 = vmatprep.mubr.f32.mxu0 0.0
        %500 = vmatmul.mubr.f32.gmra.mrb[0].mxu0 %v400
        %v501 = vpop.f32.mrb[0].mxu0
        %v502 = vadd.f32 0.0, %v501
        %v503 = vpop.f32.mrb[0].mxu0
        %v504 = vadd.f32 0.0, %v503
        %505 = vmatprep.mubr.f32.mxu0 0.0
        %506 = vmatmul.mubr.f32.gmra.mrb[0].mxu0 %v403
        %v507 = vpop.f32.mrb[0].mxu0
        %v508 = vadd.f32 0.0, %v507
        %v509 = vpop.f32.mrb[0].mxu0
        %v510 = vadd.f32 0.0, %v509
        %511 = vmatprep.mubr.f32.mxu0 0.0
        %512 = vmatmul.mubr.f32.gmra.mrb[0].mxu0 %v406
        %v513 = vpop.f32.mrb[0].mxu0
        %v514 = vadd.f32 0.0, %v513
        %v515 = vpop.f32.mrb[0].mxu0
        %v516 = vadd.f32 0.0, %v515
        %517 = vmatprep.mubr.f32.mxu0 0.0
        %518 = vmatmul.mubr.f32.gmra.mrb[0].mxu0 %v409
        %v519 = vpop.f32.mrb[0].mxu0
        %v520 = vadd.f32 0.0, %v519
        %v521 = vpop.f32.mrb[0].mxu0
        %v522 = vadd.f32 0.0, %v521
        %523 = vmatprep.mubr.f32.mxu0 0.0
        %524 = vmatmul.mubr.f32.gmra.mrb[0].mxu0 %v412
        %v525 = vpop.f32.mrb[0].mxu0
        %v526 = vadd.f32 0.0, %v525
        %v527 = vpop.f32.mrb[0].mxu0
        %v528 = vadd.f32 0.0, %v527
        %529 = vmatprep.mubr.f32.mxu0 0.0
        %530 = vmatmul.mubr.f32.gmra.mrb[0].mxu0 %v415
        %v531 = vpop.f32.mrb[0].mxu0
        %v532 = vadd.f32 0.0, %v531
        %v533 = vpop.f32.mrb[0].mxu0
        %v534 = vadd.f32 0.0, %v533
        %535 = vmatprep.mubr.f32.mxu0 0.0
        %536 = vmatmul.mubr.f32.gmra.mrb[0].mxu0 %v418
        %v537 = vpop.f32.mrb[0].mxu0
        %v538 = vadd.f32 0.0, %v537
        %v539 = vpop.f32.mrb[0].mxu0
        %v540 = vadd.f32 0.0, %v539
        %541 = vmatprep.mubr.f32.mxu0 0.0
        %542 = vmatmul.mubr.f32.gmra.mrb[0].mxu0 %v421
        %v543 = vpop.f32.mrb[0].mxu0
        %v544 = vadd.f32 0.0, %v543
        %v545 = vpop.f32.mrb[0].mxu0
        %v546 = vadd.f32 0.0, %v545
        %547 = vmatprep.mubr.f32.mxu0 0.0
        %548 = vmatmul.mubr.f32.gmra.mrb[0].mxu0 %v424
        %v549 = vpop.f32.mrb[0].mxu0
        %v550 = vadd.f32 0.0, %v549
        %v551 = vpop.f32.mrb[0].mxu0
        %v552 = vadd.f32 0.0, %v551
        %553 = vmatprep.mubr.f32.mxu0 0.0
        %554 = vmatmul.mubr.f32.gmra.mrb[0].mxu0 %v427
        %v555 = vpop.f32.mrb[0].mxu0
        %v556 = vadd.f32 0.0, %v555
        %v557 = vpop.f32.mrb[0].mxu0
        %v558 = vadd.f32 0.0, %v557
        %559 = vmatprep.mubr.f32.mxu0 0.0
        %560 = vmatmul.mubr.f32.gmra.mrb[0].mxu0 %v430
        %v561 = vpop.f32.mrb[0].mxu0
        %v562 = vadd.f32 0.0, %v561
        %v563 = vpop.f32.mrb[0].mxu0
        %v564 = vadd.f32 0.0, %v563
        %565 = vmatprep.mubr.f32.mxu0 0.0
        %566 = vmatmul.mubr.f32.gmra.mrb[0].mxu0 %v433
        %v567 = vpop.f32.mrb[0].mxu0
        %v568 = vadd.f32 0.0, %v567
        %v569 = vpop.f32.mrb[0].mxu0
        %v570 = vadd.f32 0.0, %v569
        %571 = vdwg.mxu0
        %v572 = vmul.f32 %v502, %v502
        %v573 = vmul.f32 %v504, %v504
        %v574 = vmul.f32 %v508, %v508
        %v575 = vmul.f32 %v510, %v510
        %v576 = vmul.f32 %v514, %v514
        %v577 = vmul.f32 %v516, %v516
        %v578 = vmul.f32 %v520, %v520
        %v579 = vmul.f32 %v522, %v522
        %v580 = vadd.f32 %v572, %v576
        %v581 = vadd.f32 %v573, %v577
        %v582 = vadd.f32 %v574, %v578
        %v583 = vadd.f32 %v575, %v579
        %v584 = vmul.f32 %v526, %v526
        %v585 = vmul.f32 %v528, %v528
        %v586 = vmul.f32 %v532, %v532
        %v587 = vmul.f32 %v534, %v534
        %v588 = vadd.f32 %v580, %v584
        %v589 = vadd.f32 %v581, %v585
        %v590 = vadd.f32 %v582, %v586
        %v591 = vadd.f32 %v583, %v587
        %v592 = vmax.f32 %v588, 1e-08
        %v593 = vmax.f32 %v589, 1e-08
        %v594 = vmax.f32 %v590, 1e-08
        %v595 = vmax.f32 %v591, 1e-08
        %v596 = vrsqrt.pop %v592
        %v597 = vmul.f32 %v592, %v596
        %vm598 = vcmp.eq.f32.partialorder %v592, inf
        %v599 = vsel %vm598, %v592, %v597
        %vm600 = vcmp.eq.f32.partialorder %v592, 0.0
        %v601 = vand.u32 %v592, 2147483648
        %v602 = vsel %vm600, %v601, %v599
        %v603 = vrsqrt.pop %v593
        %v604 = vmul.f32 %v593, %v603
        %vm605 = vcmp.eq.f32.partialorder %v593, inf
        %v606 = vsel %vm605, %v593, %v604
        %vm607 = vcmp.eq.f32.partialorder %v593, 0.0
        %v608 = vand.u32 %v593, 2147483648
        %v609 = vsel %vm607, %v608, %v606
        %v610 = vrsqrt.pop %v594
        %v611 = vmul.f32 %v594, %v610
        %vm612 = vcmp.eq.f32.partialorder %v594, inf
        %v613 = vsel %vm612, %v594, %v611
        %vm614 = vcmp.eq.f32.partialorder %v594, 0.0
        %v615 = vand.u32 %v594, 2147483648
        %v616 = vsel %vm614, %v615, %v613
        %v617 = vrsqrt.pop %v595
        %v618 = vmul.f32 %v595, %v617
        %vm619 = vcmp.eq.f32.partialorder %v595, inf
        %v620 = vsel %vm619, %v595, %v618
        %vm621 = vcmp.eq.f32.partialorder %v595, 0.0
        %v622 = vand.u32 %v595, 2147483648
        %v623 = vsel %vm621, %v622, %v620
        %v624 = vld [vmem:[%s3] sm:$0xff]
        %v625 = vld [vmem:[%s3 + $0x8] sm:$0xff]
        %v626 = vld [vmem:[%s3 + $0x10] sm:$0xff]
        %v627 = vld [vmem:[%s3 + $0x18] sm:$0xff]
        %v628 = vld [vmem:[%s323] sm:$0xff]
        %v629 = vld [vmem:[%s323 + $0x8] sm:$0xff]
        %v630 = vld [vmem:[%s323 + $0x10] sm:$0xff]
        %v631 = vld [vmem:[%s323 + $0x18] sm:$0xff]
        %v632 = vld [vmem:[%s323 + $0x20] sm:$0xff]
        %v633 = vld [vmem:[%s323 + $0x28] sm:$0xff]
        %v634 = vld [vmem:[%s323 + $0x30] sm:$0xff]
        %v635 = vld [vmem:[%s323 + $0x38] sm:$0xff]
        %v636 = vld [vmem:[%s4] sm:$0xff]
        %v637 = vld [vmem:[%s4 + $0x8] sm:$0xff]
        %v638 = vld [vmem:[%s4 + $0x10] sm:$0xff]
        %v639 = vld [vmem:[%s4 + $0x18] sm:$0xff]
        %vm640 = vcmask 130048
        %v642 = vsel %vm640, %v636, 0
        %v645 = vsel %vm640, %v637, 0
        %v648 = vsel %vm640, %v638, 0
        %v651 = vsel %vm640, %v639, 0
        %653 = vmatprep.subr.mxu0 %v609
        %654 = vmatpush1.msra.mxu0 %v602
        %655 = vmatprep.subr.mxu0 %v623
        %656 = vmatpush1.msra.mxu0 %v616
        %657 = vmatprep.subr.mxu0 0.0
        %658 = vmatpush1.msra.mxu0 0.0
        %659 = vmatprep.subr.mxu0 0.0
        %660 = vmatpush1.msra.mxu0 0.0
        %661 = vmatprep.subr.mxu0 0.0
        %662 = vmatpush1.msra.mxu0 0.0
        %663 = vmatprep.subr.mxu0 0.0
        %664 = vmatpush1.msra.mxu0 0.0
        %665 = vmatprep.subr.mxu0 0.0
        %666 = vmatpush1.msra.mxu0 0.0
        %667 = vmatprep.subr.mxu0 0.0
        %668 = vmatpush1.msra.mxu0 0.0
        %669 = vmatprep.subr.mxu0 0.0
        %670 = vmatpush1.msra.mxu0 0.0
        %671 = vmatprep.subr.mxu0 0.0
        %672 = vmatpush1.msra.mxu0 0.0
        %673 = vmatprep.subr.mxu0 0.0
        %674 = vmatpush1.msra.mxu0 0.0
        %675 = vmatprep.subr.mxu0 0.0
        %676 = vmatpush1.msra.mxu0 0.0
        %677 = vmatprep.subr.mxu0 0.0
        %678 = vmatpush1.msra.mxu0 0.0
        %679 = vmatprep.subr.mxu0 0.0
        %680 = vmatpush1.msra.mxu0 0.0
        %681 = vmatprep.subr.mxu0 0.0
        %682 = vmatpush1.msra.mxu0 0.0
        %683 = vmatprep.subr.mxu0 0.0
        %684 = vmatpush1.msra.mxu0 0.0
        %685 = vmatprep.subr.mxu0 0.0
        %686 = vmatpush1.msra.mxu0 0.0
        %687 = vmatprep.subr.mxu0 0.0
        %688 = vmatpush1.msra.mxu0 0.0
        %689 = vmatprep.subr.mxu0 0.0
        %690 = vmatpush1.msra.mxu0 0.0
        %691 = vmatprep.subr.mxu0 0.0
        %692 = vmatpush1.msra.mxu0 0.0
        %693 = vmatprep.subr.mxu0 0.0
        %694 = vmatpush1.msra.mxu0 0.0
        %695 = vmatprep.subr.mxu0 0.0
        %696 = vmatpush1.msra.mxu0 0.0
        %697 = vmatprep.subr.mxu0 0.0
        %698 = vmatpush1.msra.mxu0 0.0
        %699 = vmatprep.subr.mxu0 0.0
        %700 = vmatpush1.msra.mxu0 0.0
        %701 = vmatprep.subr.mxu0 0.0
        %702 = vmatpush1.msra.mxu0 0.0
        %703 = vmatprep.subr.mxu0 0.0
        %704 = vmatpush1.msra.mxu0 0.0
        %705 = vmatprep.subr.mxu0 0.0
        %706 = vmatpush1.msra.mxu0 0.0
        %707 = vmatprep.subr.mxu0 0.0
        %708 = vmatpush1.msra.mxu0 0.0
        %709 = vmatprep.subr.mxu0 0.0
        %710 = vmatpush1.msra.mxu0 0.0
        %711 = vmatprep.subr.mxu0 0.0
        %712 = vmatpush1.msra.mxu0 0.0
        %713 = vmatprep.subr.mxu0 0.0
        %714 = vmatpush1.msra.mxu0 0.0
        %715 = vmatprep.subr.mxu0 0.0
        %716 = vmatpush1.msra.mxu0 0.0
        %717 = vmatprep.mubr.f32.mxu0 0.0
        %718 = vmatmul.mubr.f32.gmra.mrb[0].mxu0 %v642
        %v719 = vpop.f32.mrb[0].mxu0
        %v720 = vadd.f32 0.0, %v719
        %v721 = vpop.f32.mrb[0].mxu0
        %v722 = vadd.f32 0.0, %v721
        %723 = vmatprep.mubr.f32.mxu0 0.0
        %724 = vmatmul.mubr.f32.gmra.mrb[0].mxu0 %v645
        %v725 = vpop.f32.mrb[0].mxu0
        %v726 = vadd.f32 0.0, %v725
        %v727 = vpop.f32.mrb[0].mxu0
        %v728 = vadd.f32 0.0, %v727
        %729 = vmatprep.mubr.f32.mxu0 0.0
        %730 = vmatmul.mubr.f32.gmra.mrb[0].mxu0 %v648
        %v731 = vpop.f32.mrb[0].mxu0
        %v732 = vadd.f32 0.0, %v731
        %v733 = vpop.f32.mrb[0].mxu0
        %v734 = vadd.f32 0.0, %v733
        %735 = vmatprep.mubr.f32.mxu0 0.0
        %736 = vmatmul.mubr.f32.gmra.mrb[0].mxu0 %v651
        %v737 = vpop.f32.mrb[0].mxu0
        %v738 = vadd.f32 0.0, %v737
        %v739 = vpop.f32.mrb[0].mxu0
        %v740 = vadd.f32 0.0, %v739
        %741 = vdwg.mxu0
        %vm742 = vcmask 261120
        %v744 = vsel %vm742, %v624, 0
        %v747 = vsel %vm742, %v625, 0
        %v750 = vsel %vm742, %v626, 0
        %v753 = vsel %vm742, %v627, 0
        %755 = vmatprep.subr.mxu0 %v629
        %756 = vmatpush1.msra.mxu0 %v628
        %757 = vmatprep.subr.mxu0 %v631
        %758 = vmatpush1.msra.mxu0 %v630
        %759 = vmatprep.subr.mxu0 %v633
        %760 = vmatpush1.msra.mxu0 %v632
        %761 = vmatprep.subr.mxu0 %v635
        %762 = vmatpush1.msra.mxu0 %v634
        %763 = vmatprep.subr.mxu0 0.0
        %764 = vmatpush1.msra.mxu0 0.0
        %765 = vmatprep.subr.mxu0 0.0
        %766 = vmatpush1.msra.mxu0 0.0
        %767 = vmatprep.subr.mxu0 0.0
        %768 = vmatpush1.msra.mxu0 0.0
        %769 = vmatprep.subr.mxu0 0.0
        %770 = vmatpush1.msra.mxu0 0.0
        %771 = vmatprep.subr.mxu0 0.0
        %772 = vmatpush1.msra.mxu0 0.0
        %773 = vmatprep.subr.mxu0 0.0
        %774 = vmatpush1.msra.mxu0 0.0
        %775 = vmatprep.subr.mxu0 0.0
        %776 = vmatpush1.msra.mxu0 0.0
        %777 = vmatprep.subr.mxu0 0.0
        %778 = vmatpush1.msra.mxu0 0.0
        %779 = vmatprep.subr.mxu0 0.0
        %780 = vmatpush1.msra.mxu0 0.0
        %781 = vmatprep.subr.mxu0 0.0
        %782 = vmatpush1.msra.mxu0 0.0
        %783 = vmatprep.subr.mxu0 0.0
        %784 = vmatpush1.msra.mxu0 0.0
        %785 = vmatprep.subr.mxu0 0.0
        %786 = vmatpush1.msra.mxu0 0.0
        %787 = vmatprep.subr.mxu0 0.0
        %788 = vmatpush1.msra.mxu0 0.0
        %789 = vmatprep.subr.mxu0 0.0
        %790 = vmatpush1.msra.mxu0 0.0
        %791 = vmatprep.subr.mxu0 0.0
        %792 = vmatpush1.msra.mxu0 0.0
        %793 = vmatprep.subr.mxu0 0.0
        %794 = vmatpush1.msra.mxu0 0.0
        %795 = vmatprep.subr.mxu0 0.0
        %796 = vmatpush1.msra.mxu0 0.0
        %797 = vmatprep.subr.mxu0 0.0
        %798 = vmatpush1.msra.mxu0 0.0
        %799 = vmatprep.subr.mxu0 0.0
        %800 = vmatpush1.msra.mxu0 0.0
        %801 = vmatprep.subr.mxu0 0.0
        %802 = vmatpush1.msra.mxu0 0.0
        %803 = vmatprep.subr.mxu0 0.0
        %804 = vmatpush1.msra.mxu0 0.0
        %805 = vmatprep.subr.mxu0 0.0
        %806 = vmatpush1.msra.mxu0 0.0
        %807 = vmatprep.subr.mxu0 0.0
        %808 = vmatpush1.msra.mxu0 0.0
        %809 = vmatprep.subr.mxu0 0.0
        %810 = vmatpush1.msra.mxu0 0.0
        %811 = vmatprep.subr.mxu0 0.0
        %812 = vmatpush1.msra.mxu0 0.0
        %813 = vmatprep.subr.mxu0 0.0
        %814 = vmatpush1.msra.mxu0 0.0
        %815 = vmatprep.subr.mxu0 0.0
        %816 = vmatpush1.msra.mxu0 0.0
        %817 = vmatprep.subr.mxu0 0.0
        %818 = vmatpush1.msra.mxu0 0.0
        %819 = vmatprep.mubr.f32.mxu0 0.0
        %820 = vmatmul.mubr.f32.gmra.mrb[0].mxu0 %v744
        %v821 = vpop.f32.mrb[0].mxu0
        %v822 = vadd.f32 %v720, %v821
        %v823 = vpop.f32.mrb[0].mxu0
        %v824 = vadd.f32 %v722, %v823
        %825 = vmatprep.mubr.f32.mxu0 0.0
        %826 = vmatmul.mubr.f32.gmra.mrb[0].mxu0 %v747
        %v827 = vpop.f32.mrb[0].mxu0
        %v828 = vadd.f32 %v726, %v827
        %v829 = vpop.f32.mrb[0].mxu0
        %v830 = vadd.f32 %v728, %v829
        %831 = vmatprep.mubr.f32.mxu0 0.0
        %832 = vmatmul.mubr.f32.gmra.mrb[0].mxu0 %v750
        %v833 = vpop.f32.mrb[0].mxu0
        %v834 = vadd.f32 %v732, %v833
        %v835 = vpop.f32.mrb[0].mxu0
        %v836 = vadd.f32 %v734, %v835
        %837 = vmatprep.mubr.f32.mxu0 0.0
        %838 = vmatmul.mubr.f32.gmra.mrb[0].mxu0 %v753
        %v839 = vpop.f32.mrb[0].mxu0
        %v840 = vadd.f32 %v738, %v839
        %v841 = vpop.f32.mrb[0].mxu0
        %v842 = vadd.f32 %v740, %v841
        %843 = vdwg.mxu0
        %v844 = vld [vmem:[%s5] sm:$0xff]
        %v845 = vld [vmem:[%s5 + $0x8] sm:$0xff]
        %v846 = vld [vmem:[%s5 + $0x10] sm:$0xff]
        %v847 = vld [vmem:[%s5 + $0x18] sm:$0xff]
        %849 = vset.pattern.permute.xlu0 0
        %850 = vperm.xlu0 %849, %v844
        %v851 = vpop.permute.xlu0 %850
        %854 = vset.pattern.permute.xlu0 0
        %855 = vperm.xlu0 %854, %v845
        %v856 = vpop.permute.xlu0 %855
        %859 = vset.pattern.permute.xlu0 0
        %860 = vperm.xlu0 %859, %v846
        %v861 = vpop.permute.xlu0 %860
        %864 = vset.pattern.permute.xlu0 0
        %865 = vperm.xlu0 %864, %v847
        %v866 = vpop.permute.xlu0 %865
        %v868 = vadd.f32 %v822, %v851
        %v869 = vadd.f32 %v824, %v851
        %v870 = vadd.f32 %v828, %v856
        %v871 = vadd.f32 %v830, %v856
        %v872 = vadd.f32 %v834, %v861
        %v873 = vadd.f32 %v836, %v861
        %v874 = vadd.f32 %v840, %v866
        %v875 = vadd.f32 %v842, %v866
        %v876 = vmax.f32 %v868, 0.0
        %v877 = vmax.f32 %v869, 0.0
        %v878 = vmax.f32 %v870, 0.0
        %v879 = vmax.f32 %v871, 0.0
        %v880 = vmax.f32 %v872, 0.0
        %v881 = vmax.f32 %v873, 0.0
        %v882 = vmax.f32 %v874, 0.0
        %v883 = vmax.f32 %v875, 0.0
        %v884 = vmin.f32 %v876, 6.0
        %v885 = vmin.f32 %v877, 6.0
        %v886 = vmin.f32 %v878, 6.0
        %v887 = vmin.f32 %v879, 6.0
        %v888 = vmin.f32 %v880, 6.0
        %v889 = vmin.f32 %v881, 6.0
        %v890 = vmin.f32 %v882, 6.0
        %v891 = vmin.f32 %v883, 6.0
        %892 = vst [vmem:[%s362] sm:$0xff] %v884
        %893 = vst [vmem:[%s362 + $0x8] sm:$0xff] %v885
        %894 = vst [vmem:[%s362 + $0x10] sm:$0xff] %v886
        %895 = vst [vmem:[%s362 + $0x18] sm:$0xff] %v887
        %896 = vst [vmem:[%s362 + $0x20] sm:$0xff] %v888
        %897 = vst [vmem:[%s362 + $0x28] sm:$0xff] %v889
        %898 = vst [vmem:[%s362 + $0x30] sm:$0xff] %v890
        %899 = vst [vmem:[%s362 + $0x38] sm:$0xff] %v891
        %v900 = vmul.f32 %v538, %v538
        %v901 = vmul.f32 %v540, %v540
        %v902 = vmul.f32 %v544, %v544
        %v903 = vmul.f32 %v546, %v546
        %v904 = vmul.f32 %v550, %v550
        %v905 = vmul.f32 %v552, %v552
        %v906 = vmul.f32 %v556, %v556
        %v907 = vmul.f32 %v558, %v558
        %v908 = vadd.f32 %v900, %v904
        %v909 = vadd.f32 %v901, %v905
        %v910 = vadd.f32 %v902, %v906
        %v911 = vadd.f32 %v903, %v907
        %v912 = vmul.f32 %v562, %v562
        %v913 = vmul.f32 %v564, %v564
        %v914 = vmul.f32 %v568, %v568
        %v915 = vmul.f32 %v570, %v570
        %v916 = vadd.f32 %v908, %v912
        %v917 = vadd.f32 %v909, %v913
        %v918 = vadd.f32 %v910, %v914
        %v919 = vadd.f32 %v911, %v915
        %v920 = vmax.f32 %v916, 1e-08
        %v921 = vmax.f32 %v917, 1e-08
        %v922 = vmax.f32 %v918, 1e-08
        %v923 = vmax.f32 %v919, 1e-08
        %v924 = vrsqrt.pop %v920
        %v925 = vmul.f32 %v920, %v924
        %vm926 = vcmp.eq.f32.partialorder %v920, inf
        %v927 = vsel %vm926, %v920, %v925
        %vm928 = vcmp.eq.f32.partialorder %v920, 0.0
        %v929 = vand.u32 %v920, 2147483648
        %v930 = vsel %vm928, %v929, %v927
        %v931 = vrsqrt.pop %v921
        %v932 = vmul.f32 %v921, %v931
        %vm933 = vcmp.eq.f32.partialorder %v921, inf
        %v934 = vsel %vm933, %v921, %v932
        %vm935 = vcmp.eq.f32.partialorder %v921, 0.0
        %v936 = vand.u32 %v921, 2147483648
        %v937 = vsel %vm935, %v936, %v934
        %v938 = vrsqrt.pop %v922
        %v939 = vmul.f32 %v922, %v938
        %vm940 = vcmp.eq.f32.partialorder %v922, inf
        %v941 = vsel %vm940, %v922, %v939
        %vm942 = vcmp.eq.f32.partialorder %v922, 0.0
        %v943 = vand.u32 %v922, 2147483648
        %v944 = vsel %vm942, %v943, %v941
        %v945 = vrsqrt.pop %v923
        %v946 = vmul.f32 %v923, %v945
        %vm947 = vcmp.eq.f32.partialorder %v923, inf
        %v948 = vsel %vm947, %v923, %v946
        %vm949 = vcmp.eq.f32.partialorder %v923, 0.0
        %v950 = vand.u32 %v923, 2147483648
        %v951 = vsel %vm949, %v950, %v948
        %v952 = vxor.u32 %v930, 2147483648
        %v953 = vxor.u32 %v937, 2147483648
        %v954 = vxor.u32 %v944, 2147483648
        %v955 = vxor.u32 %v951, 2147483648
        %v956 = vmul.f32 %v952, 1.442695
        %v957 = vpow.pop %v956
        %v958 = vmul.f32 %v953, 1.442695
        %v959 = vpow.pop %v958
        %v960 = vmul.f32 %v954, 1.442695
        %v961 = vpow.pop %v960
        %v962 = vmul.f32 %v955, 1.442695
        %v963 = vpow.pop %v962
        %v964 = vadd.f32 %v957, 1.0
        %v965 = vadd.f32 %v959, 1.0
        %v966 = vadd.f32 %v961, 1.0
        %v967 = vadd.f32 %v963, 1.0
        %v968 = vrcp.pop %v964
        %v969 = vmul.f32 1.0, %v968
        %v970 = vrcp.pop %v965
        %v971 = vmul.f32 1.0, %v970
        %v972 = vrcp.pop %v966
        %v973 = vmul.f32 1.0, %v972
        %v974 = vrcp.pop %v967
        %v975 = vmul.f32 1.0, %v974
        %v976 = vmul.f32 %v538, %v969
        %v977 = vmul.f32 %v540, %v971
        %v978 = vmul.f32 %v544, %v973
        %v979 = vmul.f32 %v546, %v975
        %980 = vst [vmem:[%s369] sm:$0xff] %v976
        %981 = vst [vmem:[%s369 + $0x8] sm:$0xff] %v977
        %982 = vst [vmem:[%s369 + $0x10] sm:$0xff] %v978
        %983 = vst [vmem:[%s369 + $0x18] sm:$0xff] %v979
        %v984 = vmul.f32 %v550, %v969
        %v985 = vmul.f32 %v552, %v971
        %v986 = vmul.f32 %v556, %v973
        %v987 = vmul.f32 %v558, %v975
        %988 = vst [vmem:[%s369 + $0x20] sm:$0xff] %v984
        %989 = vst [vmem:[%s369 + $0x28] sm:$0xff] %v985
        %990 = vst [vmem:[%s369 + $0x30] sm:$0xff] %v986
        %991 = vst [vmem:[%s369 + $0x38] sm:$0xff] %v987
        %v992 = vmul.f32 %v562, %v969
        %v993 = vmul.f32 %v564, %v971
        %v994 = vmul.f32 %v568, %v973
        %v995 = vmul.f32 %v570, %v975
        %996 = vst [vmem:[%s369 + $0x40] sm:$0xff] %v992
        %997 = vst [vmem:[%s369 + $0x48] sm:$0xff] %v993
        %998 = vst [vmem:[%s369 + $0x50] sm:$0xff] %v994
        %999 = vst [vmem:[%s369 + $0x58] sm:$0xff] %v995
        %s1000 = sand.u32 %s172, 1
        %s1001 = scalar_lea.sflag [#allocation4], %s1000
        %s1002 = sand.u32 %s172, 1
        %s1003 = smul.addr %s1002, 64
        %s1004 = scalar_lea.vmem [#allocation6], %s1003
        %s1005 = sand.u32 %s198, 1
        %s1006 = scalar_lea.sflag [#allocation8], %s1005
        %s1007 = sand.u32 %s198, 1
        %s1008 = smul.addr %s1007, 96
        %s1009 = scalar_lea.vmem [#allocation7], %s1008
        // Predicated region
        $region72: #{tpu_custom_call.1} parent=62 // pred_check
          %p1010 = pneg %p182
        $region73: #{tpu_custom_call.1} parent=62 // pred_check_branch
          %1012 = sbr.rel (%p1010) target = $region75
        $region74: #{tpu_custom_call.1} parent=62 // pred_region
          %s1013 = smul.u32 2, %s28
          %s1015 = ssub.s32 1024, 1024
          %1016 = vsyncadd %s1001, %s1015
          %s1017 = smul.addr %s1013, 128
          %s1018 = scalar_lea.hbm %s6, %s1017
          %s1019 = sshll.u32 %s1004, 4
          %s1020 = int_to_ptr.vmem [resolvable:$true] %s1019
          %1025 = dma.vmem_to_hbm [thread:$0]  %s1020, 1024, %s1018, %s1001, 256, 512, 16
        $region75: #{tpu_custom_call.1} parent=62 // pred_fallthru
          _
        // Predicated region
        $region76: #{tpu_custom_call.1} parent=62 // pred_check
          %p1026 = pneg %p208
        $region77: #{tpu_custom_call.1} parent=62 // pred_check_branch
          %1028 = sbr.rel (%p1026) target = $region79
        $region78: #{tpu_custom_call.1} parent=62 // pred_region
          %s1029 = smul.u32 2, %s28
          %s1031 = ssub.s32 1536, 1536
          %1032 = vsyncadd %s1006, %s1031
          %s1033 = smul.addr %s1029, 128
          %s1034 = scalar_lea.hbm %s7, %s1033
          %s1035 = sshll.u32 %s1009, 4
          %s1036 = int_to_ptr.vmem [resolvable:$true] %s1035
          %1041 = dma.vmem_to_hbm [thread:$0]  %s1036, 1536, %s1034, %s1006, 256, 512, 16
        $region79: #{tpu_custom_call.1} parent=62 // pred_fallthru
          _
      $region63: #{tpu_custom_call.1} parent=5 // pred_fallthru
        _
      %p1042 = scmp.le.s32.totalorder 2, %s23
      // Predicated region
      $region80: #{tpu_custom_call.1} parent=5 // pred_check
        %p1043 = pneg %p1042
      $region81: #{tpu_custom_call.1} parent=5 // pred_check_branch
        %1045 = sbr.rel (%p1043) target = $region83
      $region82: #{tpu_custom_call.1} parent=5 // pred_region
        %s1046 = ssub.s32 %s23, 2
        // Predicated region
        $region84: #{tpu_custom_call.1} parent=82 // pred_check
          %p1047 = pneg %p188
        $region85: #{tpu_custom_call.1} parent=82 // pred_check_branch
          %1049 = sbr.rel (%p1047) target = $region87
        $region86: #{tpu_custom_call.1} parent=82 // pred_region
          %s1050 = sand.u32 %s173, 1
          %s1051 = scalar_lea.sflag [#allocation4], %s1050
          %s1052 = sand.u32 %s173, 1
          %s1053 = smul.addr %s1052, 64
          %s1054 = scalar_lea.vmem [#allocation6], %s1053
          %1055 = dma.done %s1051, 1024
        $region87: #{tpu_custom_call.1} parent=82 // pred_fallthru
          _
        // Predicated region
        $region88: #{tpu_custom_call.1} parent=82 // pred_check
          %p1056 = pneg %p214
        $region89: #{tpu_custom_call.1} parent=82 // pred_check_branch
          %1058 = sbr.rel (%p1056) target = $region91
        $region90: #{tpu_custom_call.1} parent=82 // pred_region
          %s1059 = sand.u32 %s199, 1
          %s1060 = scalar_lea.sflag [#allocation8], %s1059
          %s1061 = sand.u32 %s199, 1
          %s1062 = smul.addr %s1061, 96
          %s1063 = scalar_lea.vmem [#allocation7], %s1062
          %1064 = dma.done %s1060, 1536
        $region91: #{tpu_custom_call.1} parent=82 // pred_fallthru
          _
      $region83: #{tpu_custom_call.1} parent=5 // pred_fallthru
        _
    $region6: #{tpu_custom_call.1} parent=1 // loop_footer
      %s27 = sadd.s32 1, %s23
    $region7: #{tpu_custom_call.1} parent=1 // loop_footer_branch
      %22 = sbr.rel target = $region3
    $region8: #{tpu_custom_call.1} parent=1 // loop_exit
      _
    %1065 = vsyncpa [#allocation3], 1
    %s1066 = scalar_lea.sflag [#allocation3], 1
    %1067 = vsyncpa %s1066, 1
    %1068 = vsyncpa [#allocation4], 1
    %s1069 = scalar_lea.sflag [#allocation4], 1
    %1070 = vsyncpa %s1069, 1
    %1071 = vsyncpa [#allocation8], 1
    %s1072 = scalar_lea.sflag [#allocation8], 1
    %1073 = vsyncpa %s1072, 1

</llo_original>
